<compile_context>
chip_gen: v7x
topology: tpu7x:2x2x1
jax: 0.10.0
libtpu: 0.0.40
codegen_flags: <defaults>
</compile_context>

<pallas_src>
import functools

import jax
import jax.numpy as jnp
from jax.experimental import pallas as pl
from jax.experimental.pallas import tpu as pltpu


# Tiling budgets (conservative across v5e / v6e / v7x).
_TARGET_BLOCK_BYTES = 2 * 1024 * 1024        # per input array per pipeline buffer
_CHUNK_F32_BUDGET_BYTES = 2 * 1024 * 1024    # live f32 temporaries per compute chunk
_NCHW_BLOCK_F32_BYTES = 1 * 1024 * 1024      # f32 footprint of one (tb, C, thw) tile
_MAX_CHUNKS_PER_BLOCK = 8                    # unrolled inner chunks per grid step
_VMEM_LIMIT_BYTES = 32 * 1024 * 1024         # explicit scoped-VMEM limit


def _cdiv(a, b):
    return -(-a // b)


def _round_up(a, b):
    return _cdiv(a, b) * b


def _renyi_per_position(x, y, axis, alpha):
    """Per-position Renyi divergence reduced over `axis` (the class axis).

    x -> q (input logits), y -> p (target logits); f32 in, f32 keepdims out.
    Computed in log-space for numerical stability.
    """
    mx = jnp.max(x, axis=axis, keepdims=True)
    sx = jnp.sum(jnp.exp(x - mx), axis=axis, keepdims=True)
    log_zq = mx + jnp.log(sx)                       # log partition of q

    my = jnp.max(y, axis=axis, keepdims=True)
    ey = jnp.exp(y - my)
    sy = jnp.sum(ey, axis=axis, keepdims=True)
    log_zp = my + jnp.log(sy)                       # log partition of p

    if alpha == 1:
        # KL(p || q) = sum_c p * (log p - log q)
        #            = sum_c p * ((y - x) - (log Zp - log Zq))
        p = ey * (1.0 / sy)                         # exact per-row reciprocal
        diff = (y - x) - (log_zp - log_zq)
        return jnp.sum(p * diff, axis=axis, keepdims=True)

    # 1/(alpha-1) * logsumexp_c(alpha*log p + (1-alpha)*log q)
    # with log p = y - log Zp, log q = x - log Zq: fold the per-position
    # constants out of the elementwise work.
    t_raw = alpha * y + (1.0 - alpha) * x
    const = alpha * log_zp + (1.0 - alpha) * log_zq
    mt = jnp.max(t_raw, axis=axis, keepdims=True)
    lse = mt + jnp.log(jnp.sum(jnp.exp(t_raw - mt), axis=axis, keepdims=True))
    return (lse - const) * (1.0 / (alpha - 1.0))


# --------------------------- 2-D (N, C) path ---------------------------------


def _renyi_rows_kernel(x_ref, y_ref, out_ref, *, alpha, n_rows, block_rows,
                       chunk_rows, n_chunks):
    i = pl.program_id(0)
    acc = jnp.zeros((chunk_rows, 1), jnp.float32)
    # Statically unrolled chunk loop: bounds f32 temp pressure per chunk while
    # keeping a single large DMA block per grid step.
    for c in range(n_chunks):
        r0 = c * chunk_rows
        x = x_ref[pl.ds(r0, chunk_rows), :].astype(jnp.float32)
        y = y_ref[pl.ds(r0, chunk_rows), :].astype(jnp.float32)
        per_row = _renyi_per_position(x, y, axis=-1, alpha=alpha)   # (chunk, 1)
        # Exactly zero rows past the true row count (partial last block).
        rows = (i * block_rows + r0
                + jax.lax.broadcasted_iota(jnp.int32, per_row.shape, 0))
        acc = acc + jnp.where(rows < n_rows, per_row, 0.0)
    out_ref[...] = jnp.broadcast_to(
        jnp.sum(acc, axis=0, keepdims=True), out_ref.shape)


def _renyi_2d(x, y, alpha, block_rows=None, chunk_rows=None):
    n_rows, n_cls = x.shape
    itemsize = max(x.dtype.itemsize, y.dtype.itemsize)
    sub = 8 * max(1, 4 // itemsize)                 # 8 rows f32, 16 rows bf16
    rows_ceil = _round_up(n_rows, sub)

    # Chunk: bounds the live f32 temporaries (~6 arrays of (chunk, C)).
    if chunk_rows is None:
        chunk = _CHUNK_F32_BUDGET_BYTES // (6 * 4 * max(n_cls, 1))
        chunk = max(sub, min((chunk // sub) * sub, 512))
    else:
        chunk = max(sub, _round_up(chunk_rows, sub))
    chunk = min(chunk, rows_ceil)

    # DMA block: several chunks to amortize per-grid-step overhead.
    if block_rows is None:
        n_chunks = max(1, min(_MAX_CHUNKS_PER_BLOCK,
                              _TARGET_BLOCK_BYTES
                              // max(chunk * n_cls * itemsize, 1)))
        tm = chunk * n_chunks
    else:
        tm = _round_up(block_rows, chunk)
    tm = min(tm, _round_up(rows_ceil, chunk))
    n_chunks = tm // chunk
    n_tiles = _cdiv(n_rows, tm)        # ragged last block handled by in-kernel mask

    kernel = functools.partial(
        _renyi_rows_kernel, alpha=alpha, n_rows=n_rows,
        block_rows=tm, chunk_rows=chunk, n_chunks=n_chunks)
    in_map = lambda i: (i, 0)
    out = pl.pallas_call(
        kernel,
        out_shape=jax.ShapeDtypeStruct((n_tiles, 8, 128), jnp.float32),
        grid_spec=pltpu.PrefetchScalarGridSpec(
            num_scalar_prefetch=0,
            grid=(n_tiles,),
            in_specs=[pl.BlockSpec((tm, n_cls), in_map),
                      pl.BlockSpec((tm, n_cls), in_map)],
            out_specs=pl.BlockSpec((None, 8, 128), lambda i: (i, 0, 0)),
        ),
        compiler_params=pltpu.CompilerParams(
            dimension_semantics=("parallel",),
            vmem_limit_bytes=_VMEM_LIMIT_BYTES,
        ),
    )(x, y)
    return jnp.sum(out[:, 0, 0]) / n_rows


# --------------------------- 4-D (N, C, H, W) path ---------------------------


def _renyi_nchw_kernel(x_ref, y_ref, out_ref, acc_ref, *, alpha, n_batch,
                       n_pos, block_b, block_pos):
    j = pl.program_id(1)

    @pl.when(j == 0)
    def _():
        acc_ref[...] = jnp.zeros_like(acc_ref)

    x = x_ref[...].astype(jnp.float32)              # (tb, C, thw): class on sublanes
    y = y_ref[...].astype(jnp.float32)
    per_pos = _renyi_per_position(x, y, axis=1, alpha=alpha)        # (tb, 1, thw)

    # Exactly mask padded batch items / spatial positions of partial blocks.
    bidx = (pl.program_id(0) * block_b
            + jax.lax.broadcasted_iota(jnp.int32, per_pos.shape, 0))
    cidx = j * block_pos + jax.lax.broadcasted_iota(jnp.int32, per_pos.shape, 2)
    mask = jnp.logical_and(bidx < n_batch, cidx < n_pos)
    acc_ref[...] += jnp.where(mask, per_pos, 0.0)

    @pl.when(j == pl.num_programs(1) - 1)
    def _():
        part = jnp.sum(acc_ref[...], axis=0)                        # (1, thw)
        out_ref[...] = jnp.broadcast_to(
            jnp.sum(part, axis=1, keepdims=True), out_ref.shape)


def _renyi_nchw(x, y, alpha):
    n, c, h, w = x.shape
    hw = h * w
    # Free, contiguous merge of H and W: NO HBM transpose.
    x = x.reshape(n, c, hw)
    y = y.reshape(n, c, hw)

    # Size one (tb, C, thw) block so its f32 footprint stays modest; pack
    # several batch items per block to amortize per-grid-step overhead when
    # C*H*W is small.
    pos_budget = max(128, _NCHW_BLOCK_F32_BYTES // (4 * c))
    if hw <= pos_budget:
        thw = hw
        tb = max(1, min(n, pos_budget // max(hw, 1)))
    else:
        thw = max(128, (pos_budget // 128) * 128)
        tb = 1
    hw_steps = _cdiv(hw, thw)
    nb_tiles = _cdiv(n, tb)

    kernel = functools.partial(
        _renyi_nchw_kernel, alpha=alpha, n_batch=n, n_pos=hw,
        block_b=tb, block_pos=thw)
    in_map = lambda b, j: (b, 0, j)
    out = pl.pallas_call(
        kernel,
        out_shape=jax.ShapeDtypeStruct((nb_tiles, 8, 128), jnp.float32),
        grid_spec=pltpu.PrefetchScalarGridSpec(
            num_scalar_prefetch=0,
            grid=(nb_tiles, hw_steps),
            in_specs=[pl.BlockSpec((tb, c, thw), in_map),
                      pl.BlockSpec((tb, c, thw), in_map)],
            out_specs=pl.BlockSpec((None, 8, 128), lambda b, j: (b, 0, 0)),
            scratch_shapes=[pltpu.VMEM((tb, 1, thw), jnp.float32)],
        ),
        compiler_params=pltpu.CompilerParams(
            dimension_semantics=("parallel", "arbitrary"),
            vmem_limit_bytes=_VMEM_LIMIT_BYTES,
        ),
    )(x, y)
    return jnp.sum(out[:, 0, 0]) / (n * hw)


# --------------------------------- wrapper ------------------------------------


def renyi_divergence(input_logits, target_logits, alpha=0.5, *,
                     block_rows=None, chunk_rows=None):
    """Pallas equivalent of RenyiDivergence(alpha)(input_logits, target_logits).

    Accepts 2-D (N, C) or 4-D (N, C, H, W) logits; the softmax / class axis is
    dim 1, matching the PyTorch module.
    """
    if input_logits.shape != target_logits.shape:
        raise ValueError("input and target logits must have the same shape")
    if input_logits.ndim == 2:
        return _renyi_2d(input_logits, target_logits, alpha,
                         block_rows=block_rows, chunk_rows=chunk_rows)
    if input_logits.ndim == 4:
        return _renyi_nchw(input_logits, target_logits, alpha)
    raise ValueError("expected 2-D (N, C) or 4-D (N, C, H, W) logits")


# ------------------------------ reference & test ------------------------------


def _renyi_reference(input_logits, target_logits, alpha=0.5):
    q = jax.nn.softmax(input_logits.astype(jnp.float32), axis=1)
    p = jax.nn.softmax(target_logits.astype(jnp.float32), axis=1)
    if alpha == 1:
        return jnp.mean(jnp.sum(p * jnp.log(p / q), axis=1))
    return jnp.mean(
        1.0 / (alpha - 1.0)
        * jnp.log(jnp.sum(jnp.power(p, alpha) * jnp.power(q, 1.0 - alpha), axis=1)))


if __name__ == "__main__":
    key = jax.random.PRNGKey(0)
    keys = jax.random.split(key, 8)

    # 1) 4-D NCHW logits (per-pixel class logits) — batch items packed per block.
    x4 = jax.random.normal(keys[0], (2, 4, 16, 16), dtype=jnp.float32)
    y4 = jax.random.normal(keys[1], (2, 4, 16, 16), dtype=jnp.float32)
    out = jax.block_until_ready(renyi_divergence(x4, y4, alpha=0.5))
    ref = _renyi_reference(x4, y4, alpha=0.5)
    assert jnp.allclose(out, ref, atol=2e-5, rtol=2e-5), (out, ref)

    # 2) 2-D logits, alpha == 1 (KL branch) — exact softmax denominator.
    x2 = jax.random.normal(keys[2], (8, 128), dtype=jnp.float32)
    y2 = jax.random.normal(keys[3], (8, 128), dtype=jnp.float32)
    out = jax.block_until_ready(renyi_divergence(x2, y2, alpha=1))
    ref = _renyi_reference(x2, y2, alpha=1)
    assert jnp.allclose(out, ref, atol=2e-5, rtol=2e-5), (out, ref)

    # 3) Ragged rows + forced multi-tile, multi-chunk grid: exercises the
    #    partial last block, exact masking and the unrolled chunk loop.
    x3 = jax.random.normal(keys[4], (50, 40), dtype=jnp.float32)
    y3 = jax.random.normal(keys[5], (50, 40), dtype=jnp.float32)
    out = jax.block_until_ready(
        renyi_divergence(x3, y3, alpha=2.0, block_rows=32, chunk_rows=8))
    ref = _renyi_reference(x3, y3, alpha=2.0)
    assert jnp.allclose(out, ref, atol=2e-5, rtol=2e-5), (out, ref)

    # 4) bf16 logits stay bf16 in HBM; cast to f32 happens inside the kernel.
    xb = jax.random.normal(keys[6], (48, 96), dtype=jnp.bfloat16)
    yb = jax.random.normal(keys[7], (48, 96), dtype=jnp.bfloat16)
    out = jax.block_until_ready(renyi_divergence(xb, yb, alpha=0.5))
    ref = _renyi_reference(xb, yb, alpha=0.5)
    assert jnp.allclose(out, ref, atol=2e-5, rtol=2e-5), (out, ref)

    print("KERNEL_OK")
</pallas_src>

<mosaic_0001>
module attributes {stable_mosaic.version = 11 : i64} {
  func.func @_renyi_nchw_kernel(%arg0: i32, %arg1: i32, %arg2: memref<2x4x256xf32, #tpu.memory_space<vmem>>, %arg3: memref<2x4x256xf32, #tpu.memory_space<vmem>>, %arg4: memref<1x8x128xf32, #tpu.memory_space<vmem>>, %arg5: memref<2x1x256xf32, #tpu.memory_space<vmem>>) attributes {dimension_semantics = [#tpu.dimension_semantics<parallel>, #tpu.dimension_semantics<arbitrary>], iteration_bounds = array<i64: 1, 1>, scalar_prefetch = 0 : i64, scratch_operands = 1 : i64, tpu.core_type = #tpu.core_type<tc>, window_params = [{transform_indices = @transform_0, window_bounds = array<i64: 2, 4, 256>}, {transform_indices = @transform_1, window_bounds = array<i64: 2, 4, 256>}, {transform_indices = @transform_2, window_bounds = array<i64: 1, 8, 128>}]} {
    %c0_i32 = arith.constant 0 : i32
    %0 = arith.cmpi eq, %arg1, %c0_i32 : i32
    %1 = arith.extui %0 : i1 to i32
    %c0_i32_0 = arith.constant 0 : i32
    %2 = arith.cmpi ne, %1, %c0_i32_0 : i32
    scf.if %2 {
      %cst_27 = arith.constant 0.000000e+00 : f32
      %66 = vector.broadcast %cst_27 : f32 to vector<2x1x256xf32>
      %c0_28 = arith.constant 0 : index
      %c0_29 = arith.constant 0 : index
      %c0_30 = arith.constant 0 : index
      %67 = vector.load %arg5[%c0_28, %c0_29, %c0_30] : memref<2x1x256xf32, #tpu.memory_space<vmem>>, vector<2x1x256xf32>
      tpu.vector_store %arg5[%c0_28, %c0_29, %c0_30], %66 {strides = array<i32>} : memref<2x1x256xf32, #tpu.memory_space<vmem>>, vector<2x1x256xf32>,
    } else {
    }
    %c0 = arith.constant 0 : index
    %c0_1 = arith.constant 0 : index
    %c0_2 = arith.constant 0 : index
    %3 = vector.load %arg2[%c0, %c0_1, %c0_2] : memref<2x4x256xf32, #tpu.memory_space<vmem>>, vector<2x4x256xf32>
    %c0_3 = arith.constant 0 : index
    %c0_4 = arith.constant 0 : index
    %c0_5 = arith.constant 0 : index
    %4 = vector.load %arg3[%c0_3, %c0_4, %c0_5] : memref<2x4x256xf32, #tpu.memory_space<vmem>>, vector<2x4x256xf32>
    %cst = arith.constant dense<0xFF800000> : vector<2x256xf32>
    %5 = vector.multi_reduction <maximumf>, %3, %cst [1] : vector<2x4x256xf32> to vector<2x256xf32>
    %6 = vector.shape_cast %5 : vector<2x256xf32> to vector<2x1x256xf32>
    %7 = vector.broadcast %6 : vector<2x1x256xf32> to vector<2x4x256xf32>
    %8 = arith.subf %3, %7 : vector<2x4x256xf32>
    %9 = math.exp %8 : vector<2x4x256xf32>
    %cst_6 = arith.constant dense<0.000000e+00> : vector<2x256xf32>
    %10 = vector.multi_reduction <add>, %9, %cst_6 [1] : vector<2x4x256xf32> to vector<2x256xf32>
    %11 = vector.shape_cast %10 : vector<2x256xf32> to vector<2x1x256xf32>
    %12 = math.log %11 : vector<2x1x256xf32>
    %13 = arith.addf %6, %12 : vector<2x1x256xf32>
    %cst_7 = arith.constant dense<0xFF800000> : vector<2x256xf32>
    %14 = vector.multi_reduction <maximumf>, %4, %cst_7 [1] : vector<2x4x256xf32> to vector<2x256xf32>
    %15 = vector.shape_cast %14 : vector<2x256xf32> to vector<2x1x256xf32>
    %16 = vector.broadcast %15 : vector<2x1x256xf32> to vector<2x4x256xf32>
    %17 = arith.subf %4, %16 : vector<2x4x256xf32>
    %18 = math.exp %17 : vector<2x4x256xf32>
    %cst_8 = arith.constant dense<0.000000e+00> : vector<2x256xf32>
    %19 = vector.multi_reduction <add>, %18, %cst_8 [1] : vector<2x4x256xf32> to vector<2x256xf32>
    %20 = vector.shape_cast %19 : vector<2x256xf32> to vector<2x1x256xf32>
    %21 = math.log %20 : vector<2x1x256xf32>
    %22 = arith.addf %15, %21 : vector<2x1x256xf32>
    %cst_9 = arith.constant 5.000000e-01 : f32
    %23 = vector.broadcast %cst_9 : f32 to vector<2x4x256xf32>
    %24 = arith.mulf %23, %4 : vector<2x4x256xf32>
    %cst_10 = arith.constant 5.000000e-01 : f32
    %25 = vector.broadcast %cst_10 : f32 to vector<2x4x256xf32>
    %26 = arith.mulf %25, %3 : vector<2x4x256xf32>
    %27 = arith.addf %24, %26 : vector<2x4x256xf32>
    %cst_11 = arith.constant 5.000000e-01 : f32
    %28 = vector.broadcast %cst_11 : f32 to vector<2x1x256xf32>
    %29 = arith.mulf %28, %22 : vector<2x1x256xf32>
    %cst_12 = arith.constant 5.000000e-01 : f32
    %30 = vector.broadcast %cst_12 : f32 to vector<2x1x256xf32>
    %31 = arith.mulf %30, %13 : vector<2x1x256xf32>
    %32 = arith.addf %29, %31 : vector<2x1x256xf32>
    %cst_13 = arith.constant dense<0xFF800000> : vector<2x256xf32>
    %33 = vector.multi_reduction <maximumf>, %27, %cst_13 [1] : vector<2x4x256xf32> to vector<2x256xf32>
    %34 = vector.shape_cast %33 : vector<2x256xf32> to vector<2x1x256xf32>
    %35 = vector.broadcast %34 : vector<2x1x256xf32> to vector<2x4x256xf32>
    %36 = arith.subf %27, %35 : vector<2x4x256xf32>
    %37 = math.exp %36 : vector<2x4x256xf32>
    %cst_14 = arith.constant dense<0.000000e+00> : vector<2x256xf32>
    %38 = vector.multi_reduction <add>, %37, %cst_14 [1] : vector<2x4x256xf32> to vector<2x256xf32>
    %39 = vector.shape_cast %38 : vector<2x256xf32> to vector<2x1x256xf32>
    %40 = math.log %39 : vector<2x1x256xf32>
    %41 = arith.addf %34, %40 : vector<2x1x256xf32>
    %42 = arith.subf %41, %32 : vector<2x1x256xf32>
    %cst_15 = arith.constant -2.000000e+00 : f32
    %43 = vector.broadcast %cst_15 : f32 to vector<2x1x256xf32>
    %44 = arith.mulf %42, %43 : vector<2x1x256xf32>
    %c2_i32 = arith.constant 2 : i32
    %45 = arith.muli %arg0, %c2_i32 : i32
    %46 = tpu.iota {dimensions = array<i32: 0>} : vector<2x1x256xi32>
    %47 = vector.broadcast %45 : i32 to vector<2x1x256xi32>
    %48 = arith.addi %47, %46 : vector<2x1x256xi32>
    %c256_i32 = arith.constant 256 : i32
    %49 = arith.muli %arg1, %c256_i32 : i32
    %50 = tpu.iota {dimensions = array<i32: 2>} : vector<2x1x256xi32>
    %51 = vector.broadcast %49 : i32 to vector<2x1x256xi32>
    %52 = arith.addi %51, %50 : vector<2x1x256xi32>
    %c2_i32_16 = arith.constant 2 : i32
    %53 = vector.broadcast %c2_i32_16 : i32 to vector<2x1x256xi32>
    %54 = arith.cmpi slt, %48, %53 : vector<2x1x256xi32>
    %c256_i32_17 = arith.constant 256 : i32
    %55 = vector.broadcast %c256_i32_17 : i32 to vector<2x1x256xi32>
    %56 = arith.cmpi slt, %52, %55 : vector<2x1x256xi32>
    %57 = arith.andi %54, %56 : vector<2x1x256xi1>
    %c0_18 = arith.constant 0 : index
    %c0_19 = arith.constant 0 : index
    %c0_20 = arith.constant 0 : index
    %58 = vector.load %arg5[%c0_18, %c0_19, %c0_20] : memref<2x1x256xf32, #tpu.memory_space<vmem>>, vector<2x1x256xf32>
    %cst_21 = arith.constant 0.000000e+00 : f32
    %59 = vector.broadcast %cst_21 : f32 to vector<2x1x256xf32>
    %60 = arith.select %57, %44, %59 : vector<2x1x256xi1>, vector<2x1x256xf32>
    %61 = arith.addf %58, %60 : vector<2x1x256xf32>
    %c0_22 = arith.constant 0 : index
    %c0_23 = arith.constant 0 : index
    %c0_24 = arith.constant 0 : index
    %62 = vector.load %arg5[%c0_22, %c0_23, %c0_24] : memref<2x1x256xf32, #tpu.memory_space<vmem>>, vector<2x1x256xf32>
    tpu.vector_store %arg5[%c0_22, %c0_23, %c0_24], %61 {strides = array<i32>} : memref<2x1x256xf32, #tpu.memory_space<vmem>>, vector<2x1x256xf32>,
    %c0_i32_25 = arith.constant 0 : i32
    %63 = arith.cmpi eq, %arg1, %c0_i32_25 : i32
    %64 = arith.extui %63 : i1 to i32
    %c0_i32_26 = arith.constant 0 : i32
    %65 = arith.cmpi ne, %64, %c0_i32_26 : i32
    scf.if %65 {
      %c0_27 = arith.constant 0 : index
      %c0_28 = arith.constant 0 : index
      %c0_29 = arith.constant 0 : index
      %66 = vector.load %arg5[%c0_27, %c0_28, %c0_29] : memref<2x1x256xf32, #tpu.memory_space<vmem>>, vector<2x1x256xf32>
      %cst_30 = arith.constant dense<0.000000e+00> : vector<1x256xf32>
      %67 = vector.multi_reduction <add>, %66, %cst_30 [0] : vector<2x1x256xf32> to vector<1x256xf32>
      %cst_31 = arith.constant dense<0.000000e+00> : vector<1xf32>
      %68 = vector.multi_reduction <add>, %67, %cst_31 [1] : vector<1x256xf32> to vector<1xf32>
      %69 = vector.shape_cast %68 : vector<1xf32> to vector<1x1xf32>
      %70 = vector.shape_cast %69 : vector<1x1xf32> to vector<1x1xf32>
      %71 = vector.broadcast %70 : vector<1x1xf32> to vector<8x128xf32>
      %c0_32 = arith.constant 0 : index
      %c0_33 = arith.constant 0 : index
      %c0_34 = arith.constant 0 : index
      %72 = vector.load %arg4[%c0_32, %c0_33, %c0_34] : memref<1x8x128xf32, #tpu.memory_space<vmem>>, vector<1x8x128xf32>
      %73 = vector.shape_cast %72 : vector<1x8x128xf32> to vector<8x128xf32>
      %74 = vector.shape_cast %71 : vector<8x128xf32> to vector<1x8x128xf32>
      tpu.vector_store %arg4[%c0_32, %c0_33, %c0_34], %74 {strides = array<i32>} : memref<1x8x128xf32, #tpu.memory_space<vmem>>, vector<1x8x128xf32>,
    } else {
    }
    return
  }
  func.func @transform_0(%arg0: i32, %arg1: i32) -> (i32, i32, i32) {
    %c0_i32 = arith.constant 0 : i32
    %c0_i32_0 = arith.constant 0 : i32
    return %arg0, %c0_i32, %arg1 : i32, i32, i32
  }
  func.func @transform_1(%arg0: i32, %arg1: i32) -> (i32, i32, i32) {
    %c0_i32 = arith.constant 0 : i32
    %c0_i32_0 = arith.constant 0 : i32
    return %arg0, %c0_i32, %arg1 : i32, i32, i32
  }
  func.func @transform_2(%arg0: i32, %arg1: i32) -> (i32, i32, i32) {
    %c0_i32 = arith.constant 0 : i32
    %c0_i32_0 = arith.constant 0 : i32
    %c0_i32_1 = arith.constant 0 : i32
    return %arg0, %c0_i32, %c0_i32_0 : i32, i32, i32
  }
}

</mosaic_0001>

<llo_original>
// kernel: tpu_custom_call.1
$region0: #{tpu_custom_call.1}
  #allocation0 [shape = 'u32[]', space=smem, size = 0x4, offset = 0x4, fixed_abs, tag = 'smem constant byte address 0x4 - core index']
  #allocation1 [shape = 'u32[144,128]{1,0:T(1,128)}', space=vmem, size = 0x12000, scoped, tag = 'internal scratch']
  #allocation2 [shape = 'f32[2,1,256]{2,1,0:T(1,128)}', space=vmem, size = 0x800, scoped, tag = 'scratch operand']
  %s0 = inlined_call_operand.hbm [shape: f32[2,4,256], index: 0, kind: input, shape index: {}]
  %s1 = inlined_call_operand.hbm [shape: f32[2,4,256], index: 1, kind: input, shape index: {}]
  %s2 = inlined_call_operand.hbm [shape: f32[1,8,128], index: 2, kind: output, shape index: {}]
  %s3 = sld [smem:[#allocation0]]
  $region34: #{tpu_custom_call.1} parent=0
    _
  %s5 = ssub.s32 1, %s3
  %s6 = scalar_select 0, %s5, %s3
  $region1: #{tpu_custom_call.1} parent=0
    #allocation3 [shape = 'u8[8192]{0}', space=vmem, size = 0x2000, scoped, tag = 'input window, operand 0, single buffered']
    #allocation4 [shape = 's32[1]{0}', space=sflag, size = 0x4, scoped, tag = 'scoped memory for tpu_custom_call.1']
    #allocation5 [shape = 's32[1]{0}', space=sflag, size = 0x4, scoped, tag = 'scoped memory for tpu_custom_call.1']
    #allocation6 [shape = 'u8[8192]{0}', space=vmem, size = 0x2000, scoped, tag = 'input window, operand 1, single buffered']
    #allocation7 [shape = 's32[1]{0}', space=sflag, size = 0x4, scoped, tag = 'scoped memory for tpu_custom_call.1']
    #allocation8 [shape = 'u8[4096]{0}', space=vmem, size = 0x1000, scoped, tag = 'output window, operand 0, single buffered']
    %7 = vsyncpa [#allocation4], 0
    %8 = vsyncpa [#allocation7], 0
    %9 = vsyncpa [#allocation5], 0
    // Predicated region
    $region2: #{tpu_custom_call.1} parent=1 // pred_check
      _
    $region3: #{tpu_custom_call.1} parent=1 // pred_check_branch
      %11 = sbr.rel (0) target = $region5
    $region4: #{tpu_custom_call.1} parent=1 // pred_region
      %s13 = ssub.s32 256, 256
      %14 = vsyncadd [#allocation4], %s13
      %s15 = sshll.u32 [#allocation3], 4
      %s16 = int_to_ptr.vmem [resolvable:$true] %s15
      %21 = dma.hbm_to_vmem [thread:$0]  %s0, 256, %s16, [#allocation4], 128, 128, 8
    $region5: #{tpu_custom_call.1} parent=1 // pred_fallthru
      _
    // Predicated region
    $region6: #{tpu_custom_call.1} parent=1 // pred_check
      _
    $region7: #{tpu_custom_call.1} parent=1 // pred_check_branch
      %23 = sbr.rel (0) target = $region9
    $region8: #{tpu_custom_call.1} parent=1 // pred_region
      %s25 = ssub.s32 256, 256
      %26 = vsyncadd [#allocation7], %s25
      %s27 = sshll.u32 [#allocation6], 4
      %s28 = int_to_ptr.vmem [resolvable:$true] %s27
      %33 = dma.hbm_to_vmem [thread:$0]  %s1, 256, %s28, [#allocation7], 128, 128, 8
    $region9: #{tpu_custom_call.1} parent=1 // pred_fallthru
      _
    // Predicated region
    $region10: #{tpu_custom_call.1} parent=1 // pred_check
      _
    $region11: #{tpu_custom_call.1} parent=1 // pred_check_branch
      %35 = sbr.rel (0) target = $region13
    $region12: #{tpu_custom_call.1} parent=1 // pred_region
      %36 = dma.done [#allocation4], 256
    $region13: #{tpu_custom_call.1} parent=1 // pred_fallthru
      _
    // Predicated region
    $region14: #{tpu_custom_call.1} parent=1 // pred_check
      _
    $region15: #{tpu_custom_call.1} parent=1 // pred_check_branch
      %38 = sbr.rel (0) target = $region17
    $region16: #{tpu_custom_call.1} parent=1 // pred_region
      %39 = dma.done [#allocation7], 256
    $region17: #{tpu_custom_call.1} parent=1 // pred_fallthru
      _
    %p40 = scmp.eq.s32.totalorder 0, 0
    // Predicated region
    $region18: #{tpu_custom_call.1} parent=1 // pred_check
      %p41 = pneg %p40
    $region19: #{tpu_custom_call.1} parent=1 // pred_check_branch
      %43 = sbr.rel (%p41) target = $region21
    $region20: #{tpu_custom_call.1} parent=1 // pred_region
      %v44 = vlaneseq
      %vm45 = vcmp.ge.s32.totalorder %v44, 0
      %vm46 = vcmp.lt.s32.totalorder %v44, 256
      %vm47 = vmand %vm45, %vm46
      %48 = vst.msk [vmem:[#allocation2] sm:$0x3] %vm47, 0.0
      %49 = vst.msk [vmem:[#allocation2 + $0x2] sm:$0x3] %vm47, 0.0
    $region21: #{tpu_custom_call.1} parent=1 // pred_fallthru
      _
    %v50 = vld [vmem:[#allocation3] sm:$0xff]
    %v51 = vld [vmem:[#allocation3 + $0x8] sm:$0xff]
    %v52 = vld [vmem:[#allocation6] sm:$0xff]
    %v53 = vld [vmem:[#allocation6 + $0x8] sm:$0xff]
    %v56 = vcombine.high %v50, %v50
    %v57 = vcombine.high %v51, %v51
    %vm60 = vcmask 1043456
    %v61 = vsel %vm60, %v50, -inf
    %v62 = vrot.slane %v61, 4
    %v63 = vmax.f32 %v61, %v62
    %v64 = vrot.slane %v63, 2
    %v65 = vmax.f32 %v63, %v64
    %v66 = vrot.slane %v65, 1
    %v67 = vmax.f32 %v65, %v66
    %v68 = vsel %vm60, %v56, -inf
    %v69 = vrot.slane %v68, 4
    %v70 = vmax.f32 %v68, %v69
    %v71 = vrot.slane %v70, 2
    %v72 = vmax.f32 %v70, %v71
    %v73 = vrot.slane %v72, 1
    %v74 = vmax.f32 %v72, %v73
    %v75 = vsel %vm60, %v51, -inf
    %v76 = vrot.slane %v75, 4
    %v77 = vmax.f32 %v75, %v76
    %v78 = vrot.slane %v77, 2
    %v79 = vmax.f32 %v77, %v78
    %v80 = vrot.slane %v79, 1
    %v81 = vmax.f32 %v79, %v80
    %v82 = vsel %vm60, %v57, -inf
    %v83 = vrot.slane %v82, 4
    %v84 = vmax.f32 %v82, %v83
    %v85 = vrot.slane %v84, 2
    %v86 = vmax.f32 %v84, %v85
    %v87 = vrot.slane %v86, 1
    %v88 = vmax.f32 %v86, %v87
    %v93 = vcombine.low %v67, %v74
    %v94 = vcombine.low %v81, %v88
    %v97 = vsub.f32 %v50, %v93
    %v98 = vsub.f32 %v51, %v94
    %v99 = vmul.f32 %v97, 1.442695
    %v100 = vpow.pop %v99
    %v101 = vmul.f32 %v98, 1.442695
    %v102 = vpow.pop %v101
    %v105 = vcombine.high %v100, %v100
    %v106 = vcombine.high %v102, %v102
    %v109 = vsel %vm60, %v100, 0.0
    %v110 = vrot.slane %v109, 4
    %v111 = vadd.f32 %v109, %v110
    %v112 = vrot.slane %v111, 2
    %v113 = vadd.f32 %v111, %v112
    %v114 = vrot.slane %v113, 1
    %v115 = vadd.f32 %v113, %v114
    %v116 = vsel %vm60, %v105, 0.0
    %v117 = vrot.slane %v116, 4
    %v118 = vadd.f32 %v116, %v117
    %v119 = vrot.slane %v118, 2
    %v120 = vadd.f32 %v118, %v119
    %v121 = vrot.slane %v120, 1
    %v122 = vadd.f32 %v120, %v121
    %v123 = vsel %vm60, %v102, 0.0
    %v124 = vrot.slane %v123, 4
    %v125 = vadd.f32 %v123, %v124
    %v126 = vrot.slane %v125, 2
    %v127 = vadd.f32 %v125, %v126
    %v128 = vrot.slane %v127, 1
    %v129 = vadd.f32 %v127, %v128
    %v130 = vsel %vm60, %v106, 0.0
    %v131 = vrot.slane %v130, 4
    %v132 = vadd.f32 %v130, %v131
    %v133 = vrot.slane %v132, 2
    %v134 = vadd.f32 %v132, %v133
    %v135 = vrot.slane %v134, 1
    %v136 = vadd.f32 %v134, %v135
    %v137 = vlog2.pop %v115
    %v138 = vmul.f32 %v137, 0.6931472
    %v139 = vlog2.pop %v122
    %v140 = vmul.f32 %v139, 0.6931472
    %v141 = vlog2.pop %v129
    %v142 = vmul.f32 %v141, 0.6931472
    %v143 = vlog2.pop %v136
    %v144 = vmul.f32 %v143, 0.6931472
    %v145 = vadd.f32 %v67, %v138
    %v146 = vadd.f32 %v74, %v140
    %v147 = vadd.f32 %v81, %v142
    %v148 = vadd.f32 %v88, %v144
    %v151 = vcombine.high %v52, %v52
    %v152 = vcombine.high %v53, %v53
    %v155 = vsel %vm60, %v52, -inf
    %v156 = vrot.slane %v155, 4
    %v157 = vmax.f32 %v155, %v156
    %v158 = vrot.slane %v157, 2
    %v159 = vmax.f32 %v157, %v158
    %v160 = vrot.slane %v159, 1
    %v161 = vmax.f32 %v159, %v160
    %v162 = vsel %vm60, %v151, -inf
    %v163 = vrot.slane %v162, 4
    %v164 = vmax.f32 %v162, %v163
    %v165 = vrot.slane %v164, 2
    %v166 = vmax.f32 %v164, %v165
    %v167 = vrot.slane %v166, 1
    %v168 = vmax.f32 %v166, %v167
    %v169 = vsel %vm60, %v53, -inf
    %v170 = vrot.slane %v169, 4
    %v171 = vmax.f32 %v169, %v170
    %v172 = vrot.slane %v171, 2
    %v173 = vmax.f32 %v171, %v172
    %v174 = vrot.slane %v173, 1
    %v175 = vmax.f32 %v173, %v174
    %v176 = vsel %vm60, %v152, -inf
    %v177 = vrot.slane %v176, 4
    %v178 = vmax.f32 %v176, %v177
    %v179 = vrot.slane %v178, 2
    %v180 = vmax.f32 %v178, %v179
    %v181 = vrot.slane %v180, 1
    %v182 = vmax.f32 %v180, %v181
    %v187 = vcombine.low %v161, %v168
    %v188 = vcombine.low %v175, %v182
    %v191 = vsub.f32 %v52, %v187
    %v192 = vsub.f32 %v53, %v188
    %v193 = vmul.f32 %v191, 1.442695
    %v194 = vpow.pop %v193
    %v195 = vmul.f32 %v192, 1.442695
    %v196 = vpow.pop %v195
    %v199 = vcombine.high %v194, %v194
    %v200 = vcombine.high %v196, %v196
    %v203 = vsel %vm60, %v194, 0.0
    %v204 = vrot.slane %v203, 4
    %v205 = vadd.f32 %v203, %v204
    %v206 = vrot.slane %v205, 2
    %v207 = vadd.f32 %v205, %v206
    %v208 = vrot.slane %v207, 1
    %v209 = vadd.f32 %v207, %v208
    %v210 = vsel %vm60, %v199, 0.0
    %v211 = vrot.slane %v210, 4
    %v212 = vadd.f32 %v210, %v211
    %v213 = vrot.slane %v212, 2
    %v214 = vadd.f32 %v212, %v213
    %v215 = vrot.slane %v214, 1
    %v216 = vadd.f32 %v214, %v215
    %v217 = vsel %vm60, %v196, 0.0
    %v218 = vrot.slane %v217, 4
    %v219 = vadd.f32 %v217, %v218
    %v220 = vrot.slane %v219, 2
    %v221 = vadd.f32 %v219, %v220
    %v222 = vrot.slane %v221, 1
    %v223 = vadd.f32 %v221, %v222
    %v224 = vsel %vm60, %v200, 0.0
    %v225 = vrot.slane %v224, 4
    %v226 = vadd.f32 %v224, %v225
    %v227 = vrot.slane %v226, 2
    %v228 = vadd.f32 %v226, %v227
    %v229 = vrot.slane %v228, 1
    %v230 = vadd.f32 %v228, %v229
    %v231 = vlog2.pop %v209
    %v232 = vmul.f32 %v231, 0.6931472
    %v233 = vlog2.pop %v216
    %v234 = vmul.f32 %v233, 0.6931472
    %v235 = vlog2.pop %v223
    %v236 = vmul.f32 %v235, 0.6931472
    %v237 = vlog2.pop %v230
    %v238 = vmul.f32 %v237, 0.6931472
    %v239 = vadd.f32 %v161, %v232
    %v240 = vadd.f32 %v168, %v234
    %v241 = vadd.f32 %v175, %v236
    %v242 = vadd.f32 %v182, %v238
    %v243 = vmul.f32 %v52, 0.5
    %v244 = vmul.f32 %v53, 0.5
    %v245 = vmul.f32 %v50, 0.5
    %v246 = vmul.f32 %v51, 0.5
    %v247 = vadd.f32 %v243, %v245
    %v248 = vadd.f32 %v244, %v246
    %v249 = vmul.f32 %v239, 0.5
    %v250 = vmul.f32 %v240, 0.5
    %v251 = vmul.f32 %v241, 0.5
    %v252 = vmul.f32 %v242, 0.5
    %v253 = vmul.f32 %v145, 0.5
    %v254 = vmul.f32 %v146, 0.5
    %v255 = vmul.f32 %v147, 0.5
    %v256 = vmul.f32 %v148, 0.5
    %v257 = vadd.f32 %v249, %v253
    %v258 = vadd.f32 %v250, %v254
    %v259 = vadd.f32 %v251, %v255
    %v260 = vadd.f32 %v252, %v256
    %v263 = vcombine.high %v247, %v247
    %v264 = vcombine.high %v248, %v248
    %v267 = vsel %vm60, %v247, -inf
    %v268 = vrot.slane %v267, 4
    %v269 = vmax.f32 %v267, %v268
    %v270 = vrot.slane %v269, 2
    %v271 = vmax.f32 %v269, %v270
    %v272 = vrot.slane %v271, 1
    %v273 = vmax.f32 %v271, %v272
    %v274 = vsel %vm60, %v263, -inf
    %v275 = vrot.slane %v274, 4
    %v276 = vmax.f32 %v274, %v275
    %v277 = vrot.slane %v276, 2
    %v278 = vmax.f32 %v276, %v277
    %v279 = vrot.slane %v278, 1
    %v280 = vmax.f32 %v278, %v279
    %v281 = vsel %vm60, %v248, -inf
    %v282 = vrot.slane %v281, 4
    %v283 = vmax.f32 %v281, %v282
    %v284 = vrot.slane %v283, 2
    %v285 = vmax.f32 %v283, %v284
    %v286 = vrot.slane %v285, 1
    %v287 = vmax.f32 %v285, %v286
    %v288 = vsel %vm60, %v264, -inf
    %v289 = vrot.slane %v288, 4
    %v290 = vmax.f32 %v288, %v289
    %v291 = vrot.slane %v290, 2
    %v292 = vmax.f32 %v290, %v291
    %v293 = vrot.slane %v292, 1
    %v294 = vmax.f32 %v292, %v293
    %v299 = vcombine.low %v273, %v280
    %v300 = vcombine.low %v287, %v294
    %v303 = vsub.f32 %v247, %v299
    %v304 = vsub.f32 %v248, %v300
    %v305 = vmul.f32 %v303, 1.442695
    %v306 = vpow.pop %v305
    %v307 = vmul.f32 %v304, 1.442695
    %v308 = vpow.pop %v307
    %v311 = vcombine.high %v306, %v306
    %v312 = vcombine.high %v308, %v308
    %v315 = vsel %vm60, %v306, 0.0
    %v316 = vrot.slane %v315, 4
    %v317 = vadd.f32 %v315, %v316
    %v318 = vrot.slane %v317, 2
    %v319 = vadd.f32 %v317, %v318
    %v320 = vrot.slane %v319, 1
    %v321 = vadd.f32 %v319, %v320
    %v322 = vsel %vm60, %v311, 0.0
    %v323 = vrot.slane %v322, 4
    %v324 = vadd.f32 %v322, %v323
    %v325 = vrot.slane %v324, 2
    %v326 = vadd.f32 %v324, %v325
    %v327 = vrot.slane %v326, 1
    %v328 = vadd.f32 %v326, %v327
    %v329 = vsel %vm60, %v308, 0.0
    %v330 = vrot.slane %v329, 4
    %v331 = vadd.f32 %v329, %v330
    %v332 = vrot.slane %v331, 2
    %v333 = vadd.f32 %v331, %v332
    %v334 = vrot.slane %v333, 1
    %v335 = vadd.f32 %v333, %v334
    %v336 = vsel %vm60, %v312, 0.0
    %v337 = vrot.slane %v336, 4
    %v338 = vadd.f32 %v336, %v337
    %v339 = vrot.slane %v338, 2
    %v340 = vadd.f32 %v338, %v339
    %v341 = vrot.slane %v340, 1
    %v342 = vadd.f32 %v340, %v341
    %v343 = vlog2.pop %v321
    %v344 = vmul.f32 %v343, 0.6931472
    %v345 = vlog2.pop %v328
    %v346 = vmul.f32 %v345, 0.6931472
    %v347 = vlog2.pop %v335
    %v348 = vmul.f32 %v347, 0.6931472
    %v349 = vlog2.pop %v342
    %v350 = vmul.f32 %v349, 0.6931472
    %v351 = vadd.f32 %v273, %v344
    %v352 = vadd.f32 %v280, %v346
    %v353 = vadd.f32 %v287, %v348
    %v354 = vadd.f32 %v294, %v350
    %v355 = vsub.f32 %v351, %v257
    %v356 = vsub.f32 %v352, %v258
    %v357 = vsub.f32 %v353, %v259
    %v358 = vsub.f32 %v354, %v260
    %v359 = vmul.f32 %v355, -2.0
    %v360 = vmul.f32 %v356, -2.0
    %v361 = vmul.f32 %v357, -2.0
    %v362 = vmul.f32 %v358, -2.0
    %s363 = smul.u32 0, 2
    %v364 = vstv %s363
    %v365 = vadd.s32 %v364, 1
    %s366 = smul.u32 0, 256
    %v367 = vlaneseq
    %v368 = vand.u32 %v367, 127
    %v369 = vadd.s32 %v368, 128
    %v370 = vstv %s366
    %v371 = vadd.s32 %v370, %v368
    %v372 = vadd.s32 %v370, %v369
    %vm373 = vcmp.lt.s32.totalorder %v364, 2
    %vm374 = vcmp.lt.s32.totalorder %v365, 2
    %vm375 = vcmp.lt.s32.totalorder %v371, 256
    %vm376 = vcmp.lt.s32.totalorder %v372, 256
    %vm377 = vmand %vm373, %vm375
    %vm378 = vmand %vm373, %vm376
    %vm379 = vmand %vm374, %vm375
    %vm380 = vmand %vm374, %vm376
    %v381 = vld [vmem:[#allocation2] sm:$0x3]
    %v382 = vld [vmem:[#allocation2 + $0x2] sm:$0x3]
    %v383 = vsel %vm377, %v359, 0.0
    %v384 = vsel %vm378, %v360, 0.0
    %v385 = vsel %vm379, %v361, 0.0
    %v386 = vsel %vm380, %v362, 0.0
    %v391 = vcombine.low %v383, %v384
    %v393 = vunpack.c.l.s4 1966171168
    %v394 = vunpack.c.0.s8 %v393
    %v395 = vlaneseq
    %v396 = vshrl.u32 %v395, 7
    %v397 = vsub.s32 %v394, %v396
    %v398 = vrot.slane %v391, %v397
    %v400 = vunpack.c.l.s4 1966171168
    %v401 = vunpack.c.0.s8 %v400
    %v402 = vlaneseq
    %v403 = vshrl.u32 %v402, 7
    %v404 = vsub.s32 %v401, %v403
    %v405 = vrot.slane %v398, %v404
    %v406 = vcombine.low %v385, %v386
    %v408 = vunpack.c.l.s4 1966171168
    %v409 = vunpack.c.0.s8 %v408
    %v410 = vlaneseq
    %v411 = vshrl.u32 %v410, 7
    %v412 = vsub.s32 %v409, %v411
    %v413 = vrot.slane %v406, %v412
    %v415 = vunpack.c.l.s4 1966171168
    %v416 = vunpack.c.0.s8 %v415
    %v417 = vlaneseq
    %v418 = vshrl.u32 %v417, 7
    %v419 = vsub.s32 %v416, %v418
    %v420 = vrot.slane %v413, %v419
    %v423 = vadd.f32 %v381, %v405
    %v424 = vadd.f32 %v382, %v420
    %v425 = vlaneseq
    %vm426 = vcmp.ge.s32.totalorder %v425, 0
    %vm427 = vcmp.lt.s32.totalorder %v425, 256
    %vm428 = vmand %vm426, %vm427
    %429 = vst.msk [vmem:[#allocation2] sm:$0x3] %vm428, %v423
    %430 = vst.msk [vmem:[#allocation2 + $0x2] sm:$0x3] %vm428, %v424
    // Predicated region
    $region22: #{tpu_custom_call.1} parent=1 // pred_check
      %p431 = pneg %p40
    $region23: #{tpu_custom_call.1} parent=1 // pred_check_branch
      %433 = sbr.rel (%p431) target = $region25
    $region24: #{tpu_custom_call.1} parent=1 // pred_region
      %v434 = vld [vmem:[#allocation2] sm:$0x3]
      %v435 = vld [vmem:[#allocation2 + $0x2] sm:$0x3]
      %v438 = vlaneseq
      %v439 = vshrl.u32 %v438, 7
      %v440 = vsub.s32 0, %v439
      %v441 = vrot.slane %v434, %v440
      %v442 = vlaneseq
      %v443 = vshrl.u32 %v442, 7
      %v444 = vsub.s32 1, %v443
      %v445 = vrot.slane %v434, %v444
      %v446 = vlaneseq
      %v447 = vshrl.u32 %v446, 7
      %v448 = vsub.s32 0, %v447
      %v449 = vrot.slane %v435, %v448
      %v450 = vlaneseq
      %v451 = vshrl.u32 %v450, 7
      %v452 = vsub.s32 1, %v451
      %v453 = vrot.slane %v435, %v452
      %vm458 = vcmask 1040384
      %v459 = vsel %vm458, %v441, 0.0
      %v460 = vsel %vm458, %v449, 0.0
      %v461 = vadd.f32 %v459, %v460
      %v462 = vsel %vm458, %v445, 0.0
      %v463 = vsel %vm458, %v453, 0.0
      %v464 = vadd.f32 %v462, %v463
      %v465 = vsel %vm458, %v461, 0.0
      %v466 = vsel %vm458, %v464, 0.0
      %v467 = vadd.f32 %v465, %v466
      %468 = vadd.xlane.f32.xlu0 %v467
      %v469 = vpop.xlane.xlu0 %468
      %v470 = vlaneseq
      %v471 = vshrl.u32 %v470, 7
      %v472 = vsub.s32 0, %v471
      %v473 = vrot.slane %v469, %v472
      %474 = vst [vmem:[#allocation8] sm:$0xff] %v473
    $region25: #{tpu_custom_call.1} parent=1 // pred_fallthru
      _
    // Predicated region
    $region26: #{tpu_custom_call.1} parent=1 // pred_check
      _
    $region27: #{tpu_custom_call.1} parent=1 // pred_check_branch
      %476 = sbr.rel (0) target = $region29
    $region28: #{tpu_custom_call.1} parent=1 // pred_region
      %s478 = ssub.s32 128, 128
      %479 = vsyncadd [#allocation5], %s478
      %s481 = sshll.u32 [#allocation8], 4
      %s482 = int_to_ptr.vmem [resolvable:$true] %s481
      %484 = dma.vmem_to_hbm [thread:$0]  %s482, 128, %s2, [#allocation5]
    $region29: #{tpu_custom_call.1} parent=1 // pred_fallthru
      _
    // Predicated region
    $region30: #{tpu_custom_call.1} parent=1 // pred_check
      _
    $region31: #{tpu_custom_call.1} parent=1 // pred_check_branch
      %486 = sbr.rel (0) target = $region33
    $region32: #{tpu_custom_call.1} parent=1 // pred_region
      %487 = dma.done [#allocation5], 128
    $region33: #{tpu_custom_call.1} parent=1 // pred_fallthru
      _
    %488 = vsyncpa [#allocation4], 1
    %489 = vsyncpa [#allocation7], 1
    %490 = vsyncpa [#allocation5], 1

</llo_original>
